<compile_context>
chip_gen: v7x
topology: tpu7x:2x2x1
jax: 0.10.0
libtpu: 0.0.40
codegen_flags: <defaults>
</compile_context>

<pallas_src>
import jax
import jax.numpy as jnp
from jax.experimental import pallas as pl
from jax.experimental.pallas import tpu as pltpu


def _llama_mlp_kernel(x_ref, wgu_ref, wd_ref, o_ref, acc_ref):
    # x_ref   : (TM, H)        input rows (block constant across the I axis)
    # wgu_ref : (1, H, 2*TI)   fused [gate | up] weight tile (NN layout)
    # wd_ref  : (TI, H)        down_proj weight tile (NN layout)
    # o_ref   : (TM, H)        output rows (written on the last I step)
    # acc_ref : (TM, H)        f32 accumulator over the I reduction
    k = pl.program_id(1)

    x = x_ref[...]
    wgu = wgu_ref[0]                                          # (H, 2*TI)
    gu = jnp.dot(x, wgu, preferred_element_type=jnp.float32)  # (TM, 2*TI)

    ti = wd_ref.shape[0]
    g = gu[:, :ti]
    u = gu[:, ti:]
    # silu(g) = g * sigmoid(g) = g / (1 + exp(-g)); exp + reciprocal hit the
    # EUP slot (free relative to the MXU-bound critical path).
    h = (g * pl.reciprocal(1.0 + jnp.exp(-g), approx=True)) * u

    part = jnp.dot(h.astype(wd_ref.dtype), wd_ref[...],
                   preferred_element_type=jnp.float32)        # (TM, H)

    @pl.when(k == 0)
    def _():
        acc_ref[...] = part            # first step: plain write (no zero+RMW)

    @pl.when(k != 0)
    def _():
        acc_ref[...] += part

    @pl.when(k == pl.num_programs(1) - 1)
    def _():
        o_ref[...] = acc_ref[...].astype(o_ref.dtype)


def _round_up(x, m):
    return ((x + m - 1) // m) * m


def _tpu_vmem_capacity_bytes():
    try:
        info = pltpu.get_tpu_info()
        cap = getattr(info, "vmem_capacity_bytes", None)
        if cap:
            return int(cap)
    except Exception:
        pass
    return 64 * 1024 * 1024  # conservative default (v7x-sized VMEM)


def _pick_intermediate_tile(I, H, w_itemsize, weight_budget_bytes):
    """Largest multiple-of-128 tile whose double-buffered fused gate/up and
    down weight tiles fit in the budget; prefers an exact divisor of I (no
    padded weight traffic) when one close to the cap exists."""
    cap = max(128, (weight_budget_bytes // (6 * H * w_itemsize)) // 128 * 128)
    cap = min(cap, _round_up(I, 128))
    best_div = None
    ti = 128
    while ti <= cap:
        if I % ti == 0:
            best_div = ti
        ti += 128
    if best_div is not None and 2 * best_div > cap:
        return best_div
    return cap


def _vmem_estimate(tm, ti, H, x_item, w_item, out_item):
    return (2 * tm * H * x_item          # x blocks (double-buffered)
            + 2 * tm * H * out_item      # output blocks (double-buffered)
            + 4 * ti * H * w_item        # fused (H, 2*ti) gate/up tile x2 bufs
            + 2 * ti * H * w_item        # (ti, H) down tile x2 bufs
            + tm * H * 4                 # f32 accumulator scratch
            + 6 * tm * ti * 4)           # f32 epilogue temporaries (gu/g/u/h)


def llama_mlp(x, w_gate, w_up, w_down, *, tm=None, ti=None,
              weight_vmem_budget_bytes=None):
    """LlamaMLP forward.

    x             : [B, S, H]
    w_gate, w_up  : [I, H]   (PyTorch nn.Linear weight layout [out, in])
    w_down        : [H, I]
    """
    B, S, H = x.shape
    I, H2 = w_gate.shape
    assert H2 == H and w_up.shape == (I, H) and w_down.shape == (H, I)
    M = B * S
    x2d = x.reshape(M, H)

    x_item = jnp.dtype(x.dtype).itemsize
    w_item = jnp.dtype(w_gate.dtype).itemsize

    vmem_cap = _tpu_vmem_capacity_bytes()
    big_vmem = vmem_cap >= (96 << 20)          # v5e / v6e (128 MiB VMEM)

    if weight_vmem_budget_bytes is None:
        weight_vmem_budget_bytes = (40 << 20) if big_vmem else (14 << 20)
    if ti is None:
        ti = _pick_intermediate_tile(I, H, w_item, weight_vmem_budget_bytes)
    assert ti % 128 == 0, "intermediate tile must be a multiple of 128"

    if tm is None:
        # Arithmetic intensity is ~tm flops per weight byte: keep it above the
        # compute/BW knee (v6e ~680, v7x ~620, v5e ~240 flops/B).
        tm_pref = 1024 if big_vmem else 768
        if M >= tm_pref:
            tm = tm_pref
        elif M >= 16:
            # Split rows so the parallel axis has >=2 programs (megacore /
            # v7x dual TensorCore) even for decode-sized M.
            tm = _round_up(-(-M // 2), 8)
        else:
            tm = M
        # Shrink the row tile if the VMEM working set would not fit.
        while tm > 256 and _vmem_estimate(tm, ti, H, x_item, w_item, x_item) \
                > vmem_cap - (6 << 20):
            tm //= 2
    # TODO(synk): a true v7x decode path would split the I reduction across the
    # two TensorCores (two half-I accumulators + final add); here small M only
    # gets the row split above.

    n_i = pl.cdiv(I, ti)
    I_pad = n_i * ti

    # One-time weight re-layout (load-time cost in a real model).
    if I_pad != I:
        pad = I_pad - I
        w_gate = jnp.pad(w_gate, ((0, pad), (0, 0)))
        w_up = jnp.pad(w_up, ((0, pad), (0, 0)))
        w_down = jnp.pad(w_down, ((0, 0), (0, pad)))
    wg_t = w_gate.T.reshape(H, n_i, ti).transpose(1, 0, 2)    # (n_i, H, ti)
    wu_t = w_up.T.reshape(H, n_i, ti).transpose(1, 0, 2)      # (n_i, H, ti)
    w_gu = jnp.concatenate([wg_t, wu_t], axis=-1)             # (n_i, H, 2*ti)
    w_dn = w_down.T                                           # (I_pad, H)

    grid = (pl.cdiv(M, tm), n_i)

    est = _vmem_estimate(tm, ti, H, x_item, w_item, x_item)
    vmem_limit = int(max(16 << 20, min(est + (8 << 20), vmem_cap - (2 << 20))))

    out = pl.pallas_call(
        _llama_mlp_kernel,
        out_shape=jax.ShapeDtypeStruct((M, H), x.dtype),
        grid_spec=pltpu.PrefetchScalarGridSpec(
            num_scalar_prefetch=0,
            grid=grid,
            in_specs=[
                pl.BlockSpec((tm, H), lambda i, k: (i, 0)),            # x rows
                pl.BlockSpec((1, H, 2 * ti), lambda i, k: (k, 0, 0)),  # gate|up
                pl.BlockSpec((ti, H), lambda i, k: (k, 0)),            # down
            ],
            out_specs=pl.BlockSpec((tm, H), lambda i, k: (i, 0)),
            scratch_shapes=[pltpu.VMEM((tm, H), jnp.float32)],
        ),
        compiler_params=pltpu.CompilerParams(
            dimension_semantics=("parallel", "arbitrary"),
            vmem_limit_bytes=vmem_limit,
        ),
    )(x2d, w_gu, w_dn)

    return out.reshape(B, S, H)


def llama_mlp_ref(x, w_gate, w_up, w_down):
    g = x @ w_gate.T
    u = x @ w_up.T
    h = (g * jax.nn.sigmoid(g)) * u
    return h @ w_down.T


if __name__ == "__main__":
    key = jax.random.PRNGKey(0)
    k_x, k_g, k_u, k_d = jax.random.split(key, 4)

    # Small but lane-aligned shapes (H, I multiples of 128, as in real Llama).
    batch, seq, hidden, intermediate = 2, 8, 256, 512

    x = jax.random.normal(k_x, (batch, seq, hidden), dtype=jnp.float32)
    # PyTorch nn.Linear weight layout: [out, in].
    w_gate = jax.random.normal(k_g, (intermediate, hidden), dtype=jnp.float32) * 0.05
    w_up   = jax.random.normal(k_u, (intermediate, hidden), dtype=jnp.float32) * 0.05
    w_down = jax.random.normal(k_d, (hidden, intermediate), dtype=jnp.float32) * 0.05

    ref = llama_mlp_ref(x, w_gate, w_up, w_down)

    # Tolerance is loosened slightly for the EUP approximate reciprocal in the
    # silu epilogue; real bugs produce O(0.1..1) errors at these magnitudes.
    TOL = 1e-2

    # Auto tiling (single I step at these sizes; two row tiles for M=16).
    out = jax.block_until_ready(llama_mlp(x, w_gate, w_up, w_down))
    assert out.shape == (batch, seq, hidden)
    err = float(jnp.max(jnp.abs(out - ref)))
    assert err < TOL, err

    # Small explicit tiles: exercises the multi-step reduction / accumulator path.
    out2 = jax.block_until_ready(llama_mlp(x, w_gate, w_up, w_down, tm=8, ti=128))
    err2 = float(jnp.max(jnp.abs(out2 - ref)))
    assert err2 < TOL, err2

    # Ragged intermediate size: exercises the zero-padding path (I=384, ti=256).
    i3 = 384
    w_gate3, w_up3, w_down3 = w_gate[:i3], w_up[:i3], w_down[:, :i3]
    ref3 = llama_mlp_ref(x, w_gate3, w_up3, w_down3)
    out3 = jax.block_until_ready(llama_mlp(x, w_gate3, w_up3, w_down3, ti=256))
    err3 = float(jnp.max(jnp.abs(out3 - ref3)))
    assert err3 < TOL, err3

    print("KERNEL_OK")
</pallas_src>

<mosaic_0001>
module attributes {stable_mosaic.version = 11 : i64} {
  func.func @_llama_mlp_kernel(%arg0: i32, %arg1: i32, %arg2: memref<8x256xf32, #tpu.memory_space<vmem>>, %arg3: memref<1x256x1024xf32, #tpu.memory_space<vmem>>, %arg4: memref<512x256xf32, #tpu.memory_space<vmem>>, %arg5: memref<8x256xf32, #tpu.memory_space<vmem>>, %arg6: memref<8x256xf32, #tpu.memory_space<vmem>>) attributes {dimension_semantics = [#tpu.dimension_semantics<parallel>, #tpu.dimension_semantics<arbitrary>], iteration_bounds = array<i64: 2, 1>, scalar_prefetch = 0 : i64, scratch_operands = 1 : i64, tpu.core_type = #tpu.core_type<tc>, window_params = [{transform_indices = @transform_0, window_bounds = array<i64: 8, 256>}, {transform_indices = @transform_1, window_bounds = array<i64: 1, 256, 1024>}, {transform_indices = @transform_2, window_bounds = array<i64: 512, 256>}, {transform_indices = @transform_3, window_bounds = array<i64: 8, 256>}]} {
    %c0 = arith.constant 0 : index
    %c0_0 = arith.constant 0 : index
    %0 = vector.load %arg2[%c0, %c0_0] : memref<8x256xf32, #tpu.memory_space<vmem>>, vector<8x256xf32>
    %c0_1 = arith.constant 0 : index
    %c0_2 = arith.constant 0 : index
    %c0_3 = arith.constant 0 : index
    %1 = vector.load %arg3[%c0_1, %c0_2, %c0_3] : memref<1x256x1024xf32, #tpu.memory_space<vmem>>, vector<1x256x1024xf32>
    %2 = vector.shape_cast %1 : vector<1x256x1024xf32> to vector<256x1024xf32>
    %cst = arith.constant dense<0.000000e+00> : vector<8x1024xf32>
    %3 = tpu.matmul %0, %2, %cst {dimension_numbers = #tpu.dot_dimension_numbers<[1], [0], [0], [1], [0, 0, 1, 1], [], []>} : vector<8x256xf32>, vector<256x1024xf32>, vector<8x1024xf32> -> vector<8x1024xf32>
    %4 = vector.extract_strided_slice %3 {offsets = [0, 0], sizes = [8, 512], strides = [1, 1]} : vector<8x1024xf32> to vector<8x512xf32>
    %5 = vector.extract_strided_slice %3 {offsets = [0, 512], sizes = [8, 512], strides = [1, 1]} : vector<8x1024xf32> to vector<8x512xf32>
    %cst_4 = arith.constant 0.000000e+00 : f32
    %6 = vector.broadcast %cst_4 : f32 to vector<8x512xf32>
    %7 = arith.subf %6, %4 : vector<8x512xf32>
    %8 = math.exp %7 : vector<8x512xf32>
    %cst_5 = arith.constant 1.000000e+00 : f32
    %9 = vector.broadcast %cst_5 : f32 to vector<8x512xf32>
    %10 = arith.addf %9, %8 : vector<8x512xf32>
    %11 = tpu.reciprocal %10 {approx = true} : vector<8x512xf32> -> vector<8x512xf32>
    %12 = arith.mulf %4, %11 : vector<8x512xf32>
    %13 = arith.mulf %12, %5 : vector<8x512xf32>
    %c0_6 = arith.constant 0 : index
    %c0_7 = arith.constant 0 : index
    %14 = vector.load %arg4[%c0_6, %c0_7] : memref<512x256xf32, #tpu.memory_space<vmem>>, vector<512x256xf32>
    %cst_8 = arith.constant dense<0.000000e+00> : vector<8x256xf32>
    %15 = tpu.matmul %13, %14, %cst_8 {dimension_numbers = #tpu.dot_dimension_numbers<[1], [0], [0], [1], [0, 0, 1, 1], [], []>} : vector<8x512xf32>, vector<512x256xf32>, vector<8x256xf32> -> vector<8x256xf32>
    %c0_i32 = arith.constant 0 : i32
    %16 = arith.cmpi eq, %arg1, %c0_i32 : i32
    %17 = arith.extui %16 : i1 to i32
    %c0_i32_9 = arith.constant 0 : i32
    %18 = arith.cmpi ne, %17, %c0_i32_9 : i32
    scf.if %18 {
      %c0_14 = arith.constant 0 : index
      %c0_15 = arith.constant 0 : index
      %25 = vector.load %arg6[%c0_14, %c0_15] : memref<8x256xf32, #tpu.memory_space<vmem>>, vector<8x256xf32>
      tpu.vector_store %arg6[%c0_14, %c0_15], %15 {strides = array<i32>} : memref<8x256xf32, #tpu.memory_space<vmem>>, vector<8x256xf32>,
    } else {
    }
    %c0_i32_10 = arith.constant 0 : i32
    %19 = arith.cmpi ne, %arg1, %c0_i32_10 : i32
    %20 = arith.extui %19 : i1 to i32
    %c0_i32_11 = arith.constant 0 : i32
    %21 = arith.cmpi ne, %20, %c0_i32_11 : i32
    scf.if %21 {
      %c0_14 = arith.constant 0 : index
      %c0_15 = arith.constant 0 : index
      %25 = vector.load %arg6[%c0_14, %c0_15] : memref<8x256xf32, #tpu.memory_space<vmem>>, vector<8x256xf32>
      %26 = arith.addf %25, %15 : vector<8x256xf32>
      %c0_16 = arith.constant 0 : index
      %c0_17 = arith.constant 0 : index
      %27 = vector.load %arg6[%c0_16, %c0_17] : memref<8x256xf32, #tpu.memory_space<vmem>>, vector<8x256xf32>
      tpu.vector_store %arg6[%c0_16, %c0_17], %26 {strides = array<i32>} : memref<8x256xf32, #tpu.memory_space<vmem>>, vector<8x256xf32>,
    } else {
    }
    %c0_i32_12 = arith.constant 0 : i32
    %22 = arith.cmpi eq, %arg1, %c0_i32_12 : i32
    %23 = arith.extui %22 : i1 to i32
    %c0_i32_13 = arith.constant 0 : i32
    %24 = arith.cmpi ne, %23, %c0_i32_13 : i32
    scf.if %24 {
      %c0_14 = arith.constant 0 : index
      %c0_15 = arith.constant 0 : index
      %25 = vector.load %arg6[%c0_14, %c0_15] : memref<8x256xf32, #tpu.memory_space<vmem>>, vector<8x256xf32>
      %c0_16 = arith.constant 0 : index
      %c0_17 = arith.constant 0 : index
      %26 = vector.load %arg5[%c0_16, %c0_17] : memref<8x256xf32, #tpu.memory_space<vmem>>, vector<8x256xf32>
      tpu.vector_store %arg5[%c0_16, %c0_17], %25 {strides = array<i32>} : memref<8x256xf32, #tpu.memory_space<vmem>>, vector<8x256xf32>,
    } else {
    }
    return
  }
  func.func @transform_0(%arg0: i32, %arg1: i32) -> (i32, i32) {
    %c0_i32 = arith.constant 0 : i32
    %c0_i32_0 = arith.constant 0 : i32
    return %arg0, %c0_i32 : i32, i32
  }
  func.func @transform_1(%arg0: i32, %arg1: i32) -> (i32, i32, i32) {
    %c0_i32 = arith.constant 0 : i32
    %c0_i32_0 = arith.constant 0 : i32
    %c0_i32_1 = arith.constant 0 : i32
    return %arg1, %c0_i32, %c0_i32_0 : i32, i32, i32
  }
  func.func @transform_2(%arg0: i32, %arg1: i32) -> (i32, i32) {
    %c0_i32 = arith.constant 0 : i32
    %c0_i32_0 = arith.constant 0 : i32
    return %arg1, %c0_i32 : i32, i32
  }
  func.func @transform_3(%arg0: i32, %arg1: i32) -> (i32, i32) {
    %c0_i32 = arith.constant 0 : i32
    %c0_i32_0 = arith.constant 0 : i32
    return %arg0, %c0_i32 : i32, i32
  }
}

</mosaic_0001>

<llo_original>
// kernel: tpu_custom_call.1
$region0: #{tpu_custom_call.1}
  #allocation0 [shape = 'u32[]', space=smem, size = 0x4, offset = 0x4, fixed_abs, tag = 'smem constant byte address 0x4 - core index']
  #allocation1 [shape = 'u32[144,128]{1,0:T(1,128)}', space=vmem, size = 0x12000, scoped, tag = 'internal scratch']
  #allocation2 [shape = 'f32[8,256]{1,0:T(8,128)}', space=vmem, size = 0x2000, scoped, tag = 'scratch operand']
  %s0 = inlined_call_operand.hbm [shape: f32[16,256], index: 0, kind: input, shape index: {}]
  %s1 = inlined_call_operand.hbm [shape: f32[1,256,1024], index: 1, kind: input, shape index: {}]
  %s2 = inlined_call_operand.hbm [shape: f32[512,256], index: 2, kind: input, shape index: {}]
  %s3 = inlined_call_operand.hbm [shape: f32[16,256], index: 3, kind: output, shape index: {}]
  %s4 = sld [smem:[#allocation0]]
  $region69: #{tpu_custom_call.1} parent=0
    _
  %s6 = ssub.s32 1, %s4
  %s7 = scalar_select 0, %s6, %s4
  $region1: #{tpu_custom_call.1} parent=0
    #allocation3 [shape = 'u8[16384]{0}', space=vmem, size = 0x4000, scoped, tag = 'input window, operand 0']
    #allocation4 [shape = 's32[2]{0}', space=sflag, size = 0x8, scoped, tag = 'scoped memory for tpu_custom_call.1']
    #allocation5 [shape = 's32[2]{0}', space=sflag, size = 0x8, scoped, tag = 'scoped memory for tpu_custom_call.1']
    #allocation6 [shape = 'u8[1048576]{0}', space=vmem, size = 0x100000, scoped, tag = 'input window, operand 1, single buffered']
    #allocation7 [shape = 's32[1]{0}', space=sflag, size = 0x4, scoped, tag = 'scoped memory for tpu_custom_call.1']
    #allocation8 [shape = 'u8[524288]{0}', space=vmem, size = 0x80000, scoped, tag = 'input window, operand 2, single buffered']
    #allocation9 [shape = 'u8[16384]{0}', space=vmem, size = 0x4000, scoped, tag = 'output window, operand 0']
    %8 = vsyncpa [#allocation4], 0
    %s9 = scalar_lea.sflag [#allocation4], 1
    %10 = vsyncpa %s9, 0
    %11 = vsyncpa [#allocation7], 0
    %12 = vsyncpa [#allocation5], 0
    %s13 = scalar_lea.sflag [#allocation5], 1
    %14 = vsyncpa %s13, 0
    loop: start=0, step=1, limit=4
    $region2: #{tpu_custom_call.1} parent=1 // loop_pre_header
      _
    $region3: #{tpu_custom_call.1} parent=1 // loop_header
      %s16 = sphi 0, %s20
      %p17 = scmp.ge.s32.totalorder %s16, 4
      %s23 = sphi 0, %s35
      %s24 = sphi 0, %s31
      %s25 = sphi 0, %s23
      %s26 = sphi 0, %s24
      %s27 = sphi 0, %s25
      %s28 = sphi 0, %s26
      %s38 = sphi 0, %s40
      %s41 = sphi 0, %s38
      %s42 = sphi 0, %s41
      %s58 = sphi 0, %s42
      %s64 = sphi 0, %s66
      %s67 = sphi 0, %s64
      %s68 = sphi 0, %s67
      %s84 = sphi 0, %s68
      %s90 = sphi 0, %s92
      %s93 = sphi 0, %s90
      %s94 = sphi 0, %s93
      %s110 = sphi 0, %s94
      %s116 = sphi 0, %s118
      %s119 = sphi 0, %s116
      %s120 = sphi 0, %s119
      %s136 = sphi 0, %s120
    $region4: #{tpu_custom_call.1} parent=1 // loop_header_branch
      %19 = sbr.rel (%p17) target = $region8
    $region5: #{tpu_custom_call.1} parent=1 // loop_body
      %s21 = ssub.s32 %s16, 1
      %s22 = ssub.s32 %s16, 2
      %s29 = sadd.s32 1, %s24
      %p30 = scmp.ge.s32.totalorder %s29, 1
      %s31 = scalar_select %p30, 0, %s29
      %s32 = sadd.s32 1, %s23
      %s33 = scalar_select %p30, %s32, %s23
      %p34 = scmp.ge.s32.totalorder %s33, 2
      %s35 = scalar_select %p34, 0, %s33
      %s36 = ssub.s32 %s23, %s35
      %p37 = scmp.eq.s32.totalorder %s36, 0
      %s39 = sadd.s32 %s38, 1
      %s40 = scalar_select %p37, %s38, %s39
      %p43 = pneg %p37
      %p44 = scmp.eq.s32.totalorder %s16, 1
      %p45 = por %p43, %p44
      %p46 = scmp.ne.s32.totalorder %s38, %s41
      %p47 = scmp.eq.s32.totalorder %s16, 0
      %p48 = por %p46, %p47
      %p49 = scmp.ne.s32.totalorder %s38, %s41
      %p50 = scmp.eq.s32.totalorder %s21, 1
      %p51 = por %p49, %p50
      %p52 = scmp.ne.s32.totalorder %s41, %s42
      %p53 = scmp.eq.s32.totalorder %s21, 0
      %p54 = por %p52, %p53
      %p55 = scmp.ne.s32.totalorder %s41, %s42
      %p56 = scmp.eq.s32.totalorder %s22, 1
      %p57 = por %p55, %p56
      %p59 = scmp.ne.s32.totalorder %s42, %s58
      %p60 = scmp.eq.s32.totalorder %s22, 0
      %p61 = por %p59, %p60
      %s62 = ssub.s32 %s24, %s31
      %p63 = scmp.eq.s32.totalorder %s62, 0
      %s65 = sadd.s32 %s64, 1
      %s66 = scalar_select %p63, %s64, %s65
      %p69 = pneg %p63
      %p70 = scmp.eq.s32.totalorder %s16, 1
      %p71 = por %p69, %p70
      %p72 = scmp.ne.s32.totalorder %s64, %s67
      %p73 = scmp.eq.s32.totalorder %s16, 0
      %p74 = por %p72, %p73
      %p75 = scmp.ne.s32.totalorder %s64, %s67
      %p76 = scmp.eq.s32.totalorder %s21, 1
      %p77 = por %p75, %p76
      %p78 = scmp.ne.s32.totalorder %s67, %s68
      %p79 = scmp.eq.s32.totalorder %s21, 0
      %p80 = por %p78, %p79
      %p81 = scmp.ne.s32.totalorder %s67, %s68
      %p82 = scmp.eq.s32.totalorder %s22, 1
      %p83 = por %p81, %p82
      %p85 = scmp.ne.s32.totalorder %s68, %s84
      %p86 = scmp.eq.s32.totalorder %s22, 0
      %p87 = por %p85, %p86
      %s88 = ssub.s32 %s24, %s31
      %p89 = scmp.eq.s32.totalorder %s88, 0
      %s91 = sadd.s32 %s90, 1
      %s92 = scalar_select %p89, %s90, %s91
      %p95 = pneg %p89
      %p96 = scmp.eq.s32.totalorder %s16, 1
      %p97 = por %p95, %p96
      %p98 = scmp.ne.s32.totalorder %s90, %s93
      %p99 = scmp.eq.s32.totalorder %s16, 0
      %p100 = por %p98, %p99
      %p101 = scmp.ne.s32.totalorder %s90, %s93
      %p102 = scmp.eq.s32.totalorder %s21, 1
      %p103 = por %p101, %p102
      %p104 = scmp.ne.s32.totalorder %s93, %s94
      %p105 = scmp.eq.s32.totalorder %s21, 0
      %p106 = por %p104, %p105
      %p107 = scmp.ne.s32.totalorder %s93, %s94
      %p108 = scmp.eq.s32.totalorder %s22, 1
      %p109 = por %p107, %p108
      %p111 = scmp.ne.s32.totalorder %s94, %s110
      %p112 = scmp.eq.s32.totalorder %s22, 0
      %p113 = por %p111, %p112
      %s114 = ssub.s32 %s23, %s35
      %p115 = scmp.eq.s32.totalorder %s114, 0
      %s117 = sadd.s32 %s116, 1
      %s118 = scalar_select %p115, %s116, %s117
      %p121 = pneg %p115
      %p122 = scmp.eq.s32.totalorder %s16, 1
      %p123 = por %p121, %p122
      %p124 = scmp.ne.s32.totalorder %s116, %s119
      %p125 = scmp.eq.s32.totalorder %s16, 0
      %p126 = por %p124, %p125
      %p127 = scmp.ne.s32.totalorder %s116, %s119
      %p128 = scmp.eq.s32.totalorder %s21, 1
      %p129 = por %p127, %p128
      %p130 = scmp.ne.s32.totalorder %s119, %s120
      %p131 = scmp.eq.s32.totalorder %s21, 0
      %p132 = por %p130, %p131
      %p133 = scmp.ne.s32.totalorder %s119, %s120
      %p134 = scmp.eq.s32.totalorder %s22, 1
      %p135 = por %p133, %p134
      %p137 = scmp.ne.s32.totalorder %s120, %s136
      %p138 = scmp.eq.s32.totalorder %s22, 0
      %p139 = por %p137, %p138
      %p140 = scmp.le.s32.totalorder 1, %s16
      %p141 = scmp.lt.s32.totalorder %s16, 3
      %p142 = pnand %p140, %p141
      %p143 = pneg %p142
      // Predicated region
      $region9: #{tpu_custom_call.1} parent=5 // pred_check
        _
      $region10: #{tpu_custom_call.1} parent=5 // pred_check_branch
        %145 = sbr.rel (%p142) target = $region12
      $region11: #{tpu_custom_call.1} parent=5 // pred_region
        %s146 = ssub.s32 %s16, 1
        // Predicated region
        $region13: #{tpu_custom_call.1} parent=11 // pred_check
          %p147 = pneg %p80
        $region14: #{tpu_custom_call.1} parent=11 // pred_check_branch
          %149 = sbr.rel (%p147) target = $region16
        $region15: #{tpu_custom_call.1} parent=11 // pred_region
          %s151 = ssub.s32 32768, 32768
          %152 = vsyncadd [#allocation7], %s151
          %s153 = smul.addr %s26, 256
          %s154 = smul.addr %s153, 128
          %s155 = scalar_lea.hbm %s1, %s154
          %s156 = sshll.u32 [#allocation6], 4
          %s157 = int_to_ptr.vmem [resolvable:$true] %s156
          %162 = dma.hbm_to_vmem [thread:$0]  %s155, 32768, %s157, [#allocation7], 1024, 1024, 64
        $region16: #{tpu_custom_call.1} parent=11 // pred_fallthru
          _
        // Predicated region
        $region17: #{tpu_custom_call.1} parent=11 // pred_check
          %p163 = pneg %p106
        $region18: #{tpu_custom_call.1} parent=11 // pred_check_branch
          %165 = sbr.rel (%p163) target = $region20
        $region19: #{tpu_custom_call.1} parent=11 // pred_region
          %s166 = smul.u32 64, %s26
          %s168 = ssub.s32 16384, 16384
          %169 = vsyncadd [#allocation7], %s168
          %s170 = smul.addr %s166, 2
          %s171 = smul.addr %s170, 128
          %s172 = scalar_lea.hbm %s2, %s171
          %s173 = sshll.u32 [#allocation8], 4
          %s174 = int_to_ptr.vmem [resolvable:$true] %s173
          %179 = dma.hbm_to_vmem [thread:$0]  %s172, 16384, %s174, [#allocation7], 256, 256, 16
        $region20: #{tpu_custom_call.1} parent=11 // pred_fallthru
          _
      $region12: #{tpu_custom_call.1} parent=5 // pred_fallthru
        _
      %p180 = scmp.lt.s32.totalorder %s16, 2
      // Predicated region
      $region21: #{tpu_custom_call.1} parent=5 // pred_check
        %p181 = pneg %p180
      $region22: #{tpu_custom_call.1} parent=5 // pred_check_branch
        %183 = sbr.rel (%p181) target = $region24
      $region23: #{tpu_custom_call.1} parent=5 // pred_region
        // Predicated region
        $region25: #{tpu_custom_call.1} parent=23 // pred_check
          %p184 = pneg %p48
        $region26: #{tpu_custom_call.1} parent=23 // pred_check_branch
          %186 = sbr.rel (%p184) target = $region28
        $region27: #{tpu_custom_call.1} parent=23 // pred_region
          %s187 = sand.u32 %s38, 1
          %s188 = scalar_lea.sflag [#allocation4], %s187
          %s189 = sand.u32 %s38, 1
          %s190 = smul.addr %s189, 16
          %s191 = scalar_lea.vmem [#allocation3], %s190
          %s193 = ssub.s32 256, 256
          %194 = vsyncadd %s188, %s193
          %s195 = smul.addr %s23, 2
          %s196 = smul.addr %s195, 128
          %s197 = scalar_lea.hbm %s0, %s196
          %s199 = sshll.u32 %s191, 4
          %s200 = int_to_ptr.vmem [resolvable:$true] %s199
          %202 = dma.hbm_to_vmem [thread:$0]  %s197, 256, %s200, %s188
        $region28: #{tpu_custom_call.1} parent=23 // pred_fallthru
          _
      $region24: #{tpu_custom_call.1} parent=5 // pred_fallthru
        _
      %p203 = scmp.le.s32.totalorder 1, %s16
      %p204 = scmp.lt.s32.totalorder %s16, 3
      %p205 = pnand %p203, %p204
      %p206 = pneg %p205
      // Predicated region
      $region29: #{tpu_custom_call.1} parent=5 // pred_check
        _
      $region30: #{tpu_custom_call.1} parent=5 // pred_check_branch
        %208 = sbr.rel (%p205) target = $region32
      $region31: #{tpu_custom_call.1} parent=5 // pred_region
        %s209 = ssub.s32 %s16, 1
        %s210 = sand.u32 %s41, 1
        %s211 = scalar_lea.sflag [#allocation4], %s210
        %s212 = sand.u32 %s41, 1
        %s213 = smul.addr %s212, 16
        %s214 = scalar_lea.vmem [#allocation3], %s213
        // Predicated region
        $region33: #{tpu_custom_call.1} parent=31 // pred_check
          %p215 = pneg %p54
        $region34: #{tpu_custom_call.1} parent=31 // pred_check_branch
          %217 = sbr.rel (%p215) target = $region36
        $region35: #{tpu_custom_call.1} parent=31 // pred_region
          %218 = dma.done %s211, 256
        $region36: #{tpu_custom_call.1} parent=31 // pred_fallthru
          _
        // Predicated region
        $region37: #{tpu_custom_call.1} parent=31 // pred_check
          %p219 = pneg %p80
        $region38: #{tpu_custom_call.1} parent=31 // pred_check_branch
          %221 = sbr.rel (%p219) target = $region40
        $region39: #{tpu_custom_call.1} parent=31 // pred_region
          %222 = dma.done [#allocation7], 32768
        $region40: #{tpu_custom_call.1} parent=31 // pred_fallthru
          _
        // Predicated region
        $region41: #{tpu_custom_call.1} parent=31 // pred_check
          %p223 = pneg %p106
        $region42: #{tpu_custom_call.1} parent=31 // pred_check_branch
          %225 = sbr.rel (%p223) target = $region44
        $region43: #{tpu_custom_call.1} parent=31 // pred_region
          %226 = dma.done [#allocation7], 16384
        $region44: #{tpu_custom_call.1} parent=31 // pred_fallthru
          _
        %s227 = sand.u32 %s41, 1
        %s228 = scalar_lea.sflag [#allocation4], %s227
        %s229 = sand.u32 %s41, 1
        %s230 = smul.addr %s229, 16
        %s231 = scalar_lea.vmem [#allocation3], %s230
        %p232 = pneg %p54
        %p233 = pneg %p51
        %p234 = pneg %p80
        %p235 = pneg %p77
        %p236 = pneg %p106
        %p237 = pneg %p103
        %p238 = pneg %p132
        %p239 = pneg %p129
        %s240 = sand.u32 %s119, 1
        %s241 = scalar_lea.sflag [#allocation5], %s240
        %s242 = sand.u32 %s119, 1
        %s243 = smul.addr %s242, 16
        %s244 = scalar_lea.vmem [#allocation9], %s243
        %s245 = smul.u32 64, %s26
        %v246 = vld [vmem:[%s214] sm:$0xff]
        %v247 = vld [vmem:[%s214 + $0x8] sm:$0xff]
        %v248 = vld [vmem:[#allocation6] sm:$0xff]
        %v249 = vld [vmem:[#allocation6 + $0x8] sm:$0xff]
        %v250 = vld [vmem:[#allocation6 + $0x10] sm:$0xff]
        %v251 = vld [vmem:[#allocation6 + $0x18] sm:$0xff]
        %v252 = vld [vmem:[#allocation6 + $0x20] sm:$0xff]
        %v253 = vld [vmem:[#allocation6 + $0x28] sm:$0xff]
        %v254 = vld [vmem:[#allocation6 + $0x30] sm:$0xff]
        %v255 = vld [vmem:[#allocation6 + $0x38] sm:$0xff]
        %v256 = vld [vmem:[#allocation6 + $0x40] sm:$0xff]
        %v257 = vld [vmem:[#allocation6 + $0x48] sm:$0xff]
        %v258 = vld [vmem:[#allocation6 + $0x50] sm:$0xff]
        %v259 = vld [vmem:[#allocation6 + $0x58] sm:$0xff]
        %v260 = vld [vmem:[#allocation6 + $0x60] sm:$0xff]
        %v261 = vld [vmem:[#allocation6 + $0x68] sm:$0xff]
        %v262 = vld [vmem:[#allocation6 + $0x70] sm:$0xff]
        %v263 = vld [vmem:[#allocation6 + $0x78] sm:$0xff]
        %v264 = vld [vmem:[#allocation6 + $0x80] sm:$0xff]
        %v265 = vld [vmem:[#allocation6 + $0x88] sm:$0xff]
        %v266 = vld [vmem:[#allocation6 + $0x90] sm:$0xff]
        %v267 = vld [vmem:[#allocation6 + $0x98] sm:$0xff]
        %v268 = vld [vmem:[#allocation6 + $0xa0] sm:$0xff]
        %v269 = vld [vmem:[#allocation6 + $0xa8] sm:$0xff]
        %v270 = vld [vmem:[#allocation6 + $0xb0] sm:$0xff]
        %v271 = vld [vmem:[#allocation6 + $0xb8] sm:$0xff]
        %v272 = vld [vmem:[#allocation6 + $0xc0] sm:$0xff]
        %v273 = vld [vmem:[#allocation6 + $0xc8] sm:$0xff]
        %v274 = vld [vmem:[#allocation6 + $0xd0] sm:$0xff]
        %v275 = vld [vmem:[#allocation6 + $0xd8] sm:$0xff]
        %v276 = vld [vmem:[#allocation6 + $0xe0] sm:$0xff]
        %v277 = vld [vmem:[#allocation6 + $0xe8] sm:$0xff]
        %v278 = vld [vmem:[#allocation6 + $0xf0] sm:$0xff]
        %v279 = vld [vmem:[#allocation6 + $0xf8] sm:$0xff]
        %v280 = vld [vmem:[#allocation6 + $0x100] sm:$0xff]
        %v281 = vld [vmem:[#allocation6 + $0x108] sm:$0xff]
        %v282 = vld [vmem:[#allocation6 + $0x110] sm:$0xff]
        %v283 = vld [vmem:[#allocation6 + $0x118] sm:$0xff]
        %v284 = vld [vmem:[#allocation6 + $0x120] sm:$0xff]
        %v285 = vld [vmem:[#allocation6 + $0x128] sm:$0xff]
        %v286 = vld [vmem:[#allocation6 + $0x130] sm:$0xff]
        %v287 = vld [vmem:[#allocation6 + $0x138] sm:$0xff]
        %v288 = vld [vmem:[#allocation6 + $0x140] sm:$0xff]
        %v289 = vld [vmem:[#allocation6 + $0x148] sm:$0xff]
        %v290 = vld [vmem:[#allocation6 + $0x150] sm:$0xff]
        %v291 = vld [vmem:[#allocation6 + $0x158] sm:$0xff]
        %v292 = vld [vmem:[#allocation6 + $0x160] sm:$0xff]
        %v293 = vld [vmem:[#allocation6 + $0x168] sm:$0xff]
        %v294 = vld [vmem:[#allocation6 + $0x170] sm:$0xff]
        %v295 = vld [vmem:[#allocation6 + $0x178] sm:$0xff]
        %v296 = vld [vmem:[#allocation6 + $0x180] sm:$0xff]
        %v297 = vld [vmem:[#allocation6 + $0x188] sm:$0xff]
        %v298 = vld [vmem:[#allocation6 + $0x190] sm:$0xff]
        %v299 = vld [vmem:[#allocation6 + $0x198] sm:$0xff]
        %v300 = vld [vmem:[#allocation6 + $0x1a0] sm:$0xff]
        %v301 = vld [vmem:[#allocation6 + $0x1a8] sm:$0xff]
        %v302 = vld [vmem:[#allocation6 + $0x1b0] sm:$0xff]
        %v303 = vld [vmem:[#allocation6 + $0x1b8] sm:$0xff]
        %v304 = vld [vmem:[#allocation6 + $0x1c0] sm:$0xff]
        %v305 = vld [vmem:[#allocation6 + $0x1c8] sm:$0xff]
        %v306 = vld [vmem:[#allocation6 + $0x1d0] sm:$0xff]
        %v307 = vld [vmem:[#allocation6 + $0x1d8] sm:$0xff]
        %v308 = vld [vmem:[#allocation6 + $0x1e0] sm:$0xff]
        %v309 = vld [vmem:[#allocation6 + $0x1e8] sm:$0xff]
        %v310 = vld [vmem:[#allocation6 + $0x1f0] sm:$0xff]
        %v311 = vld [vmem:[#allocation6 + $0x1f8] sm:$0xff]
        %v312 = vld [vmem:[#allocation6 + $0x200] sm:$0xff]
        %v313 = vld [vmem:[#allocation6 + $0x208] sm:$0xff]
        %v314 = vld [vmem:[#allocation6 + $0x210] sm:$0xff]
        %v315 = vld [vmem:[#allocation6 + $0x218] sm:$0xff]
        %v316 = vld [vmem:[#allocation6 + $0x220] sm:$0xff]
        %v317 = vld [vmem:[#allocation6 + $0x228] sm:$0xff]
        %v318 = vld [vmem:[#allocation6 + $0x230] sm:$0xff]
        %v319 = vld [vmem:[#allocation6 + $0x238] sm:$0xff]
        %v320 = vld [vmem:[#allocation6 + $0x240] sm:$0xff]
        %v321 = vld [vmem:[#allocation6 + $0x248] sm:$0xff]
        %v322 = vld [vmem:[#allocation6 + $0x250] sm:$0xff]
        %v323 = vld [vmem:[#allocation6 + $0x258] sm:$0xff]
        %v324 = vld [vmem:[#allocation6 + $0x260] sm:$0xff]
        %v325 = vld [vmem:[#allocation6 + $0x268] sm:$0xff]
        %v326 = vld [vmem:[#allocation6 + $0x270] sm:$0xff]
        %v327 = vld [vmem:[#allocation6 + $0x278] sm:$0xff]
        %v328 = vld [vmem:[#allocation6 + $0x280] sm:$0xff]
        %v329 = vld [vmem:[#allocation6 + $0x288] sm:$0xff]
        %v330 = vld [vmem:[#allocation6 + $0x290] sm:$0xff]
        %v331 = vld [vmem:[#allocation6 + $0x298] sm:$0xff]
        %v332 = vld [vmem:[#allocation6 + $0x2a0] sm:$0xff]
        %v333 = vld [vmem:[#allocation6 + $0x2a8] sm:$0xff]
        %v334 = vld [vmem:[#allocation6 + $0x2b0] sm:$0xff]
        %v335 = vld [vmem:[#allocation6 + $0x2b8] sm:$0xff]
        %v336 = vld [vmem:[#allocation6 + $0x2c0] sm:$0xff]
        %v337 = vld [vmem:[#allocation6 + $0x2c8] sm:$0xff]
        %v338 = vld [vmem:[#allocation6 + $0x2d0] sm:$0xff]
        %v339 = vld [vmem:[#allocation6 + $0x2d8] sm:$0xff]
        %v340 = vld [vmem:[#allocation6 + $0x2e0] sm:$0xff]
        %v341 = vld [vmem:[#allocation6 + $0x2e8] sm:$0xff]
        %v342 = vld [vmem:[#allocation6 + $0x2f0] sm:$0xff]
        %v343 = vld [vmem:[#allocation6 + $0x2f8] sm:$0xff]
        %v344 = vld [vmem:[#allocation6 + $0x300] sm:$0xff]
        %v345 = vld [vmem:[#allocation6 + $0x308] sm:$0xff]
        %v346 = vld [vmem:[#allocation6 + $0x310] sm:$0xff]
        %v347 = vld [vmem:[#allocation6 + $0x318] sm:$0xff]
        %v348 = vld [vmem:[#allocation6 + $0x320] sm:$0xff]
        %v349 = vld [vmem:[#allocation6 + $0x328] sm:$0xff]
        %v350 = vld [vmem:[#allocation6 + $0x330] sm:$0xff]
        %v351 = vld [vmem:[#allocation6 + $0x338] sm:$0xff]
        %v352 = vld [vmem:[#allocation6 + $0x340] sm:$0xff]
        %v353 = vld [vmem:[#allocation6 + $0x348] sm:$0xff]
        %v354 = vld [vmem:[#allocation6 + $0x350] sm:$0xff]
        %v355 = vld [vmem:[#allocation6 + $0x358] sm:$0xff]
        %v356 = vld [vmem:[#allocation6 + $0x360] sm:$0xff]
        %v357 = vld [vmem:[#allocation6 + $0x368] sm:$0xff]
        %v358 = vld [vmem:[#allocation6 + $0x370] sm:$0xff]
        %v359 = vld [vmem:[#allocation6 + $0x378] sm:$0xff]
        %v360 = vld [vmem:[#allocation6 + $0x380] sm:$0xff]
        %v361 = vld [vmem:[#allocation6 + $0x388] sm:$0xff]
        %v362 = vld [vmem:[#allocation6 + $0x390] sm:$0xff]
        %v363 = vld [vmem:[#allocation6 + $0x398] sm:$0xff]
        %v364 = vld [vmem:[#allocation6 + $0x3a0] sm:$0xff]
        %v365 = vld [vmem:[#allocation6 + $0x3a8] sm:$0xff]
        %v366 = vld [vmem:[#allocation6 + $0x3b0] sm:$0xff]
        %v367 = vld [vmem:[#allocation6 + $0x3b8] sm:$0xff]
        %v368 = vld [vmem:[#allocation6 + $0x3c0] sm:$0xff]
        %v369 = vld [vmem:[#allocation6 + $0x3c8] sm:$0xff]
        %v370 = vld [vmem:[#allocation6 + $0x3d0] sm:$0xff]
        %v371 = vld [vmem:[#allocation6 + $0x3d8] sm:$0xff]
        %v372 = vld [vmem:[#allocation6 + $0x3e0] sm:$0xff]
        %v373 = vld [vmem:[#allocation6 + $0x3e8] sm:$0xff]
        %v374 = vld [vmem:[#allocation6 + $0x3f0] sm:$0xff]
        %v375 = vld [vmem:[#allocation6 + $0x3f8] sm:$0xff]
        %v376 = vld [vmem:[#allocation6 + $0x400] sm:$0xff]
        %v377 = vld [vmem:[#allocation6 + $0x408] sm:$0xff]
        %v378 = vld [vmem:[#allocation6 + $0x410] sm:$0xff]
        %v379 = vld [vmem:[#allocation6 + $0x418] sm:$0xff]
        %v380 = vld [vmem:[#allocation6 + $0x420] sm:$0xff]
        %v381 = vld [vmem:[#allocation6 + $0x428] sm:$0xff]
        %v382 = vld [vmem:[#allocation6 + $0x430] sm:$0xff]
        %v383 = vld [vmem:[#allocation6 + $0x438] sm:$0xff]
        %v384 = vld [vmem:[#allocation6 + $0x440] sm:$0xff]
        %v385 = vld [vmem:[#allocation6 + $0x448] sm:$0xff]
        %v386 = vld [vmem:[#allocation6 + $0x450] sm:$0xff]
        %v387 = vld [vmem:[#allocation6 + $0x458] sm:$0xff]
        %v388 = vld [vmem:[#allocation6 + $0x460] sm:$0xff]
        %v389 = vld [vmem:[#allocation6 + $0x468] sm:$0xff]
        %v390 = vld [vmem:[#allocation6 + $0x470] sm:$0xff]
        %v391 = vld [vmem:[#allocation6 + $0x478] sm:$0xff]
        %v392 = vld [vmem:[#allocation6 + $0x480] sm:$0xff]
        %v393 = vld [vmem:[#allocation6 + $0x488] sm:$0xff]
        %v394 = vld [vmem:[#allocation6 + $0x490] sm:$0xff]
        %v395 = vld [vmem:[#allocation6 + $0x498] sm:$0xff]
        %v396 = vld [vmem:[#allocation6 + $0x4a0] sm:$0xff]
        %v397 = vld [vmem:[#allocation6 + $0x4a8] sm:$0xff]
        %v398 = vld [vmem:[#allocation6 + $0x4b0] sm:$0xff]
        %v399 = vld [vmem:[#allocation6 + $0x4b8] sm:$0xff]
        %v400 = vld [vmem:[#allocation6 + $0x4c0] sm:$0xff]
        %v401 = vld [vmem:[#allocation6 + $0x4c8] sm:$0xff]
        %v402 = vld [vmem:[#allocation6 + $0x4d0] sm:$0xff]
        %v403 = vld [vmem:[#allocation6 + $0x4d8] sm:$0xff]
        %v404 = vld [vmem:[#allocation6 + $0x4e0] sm:$0xff]
        %v405 = vld [vmem:[#allocation6 + $0x4e8] sm:$0xff]
        %v406 = vld [vmem:[#allocation6 + $0x4f0] sm:$0xff]
        %v407 = vld [vmem:[#allocation6 + $0x4f8] sm:$0xff]
        %v408 = vld [vmem:[#allocation6 + $0x500] sm:$0xff]
        %v409 = vld [vmem:[#allocation6 + $0x508] sm:$0xff]
        %v410 = vld [vmem:[#allocation6 + $0x510] sm:$0xff]
        %v411 = vld [vmem:[#allocation6 + $0x518] sm:$0xff]
        %v412 = vld [vmem:[#allocation6 + $0x520] sm:$0xff]
        %v413 = vld [vmem:[#allocation6 + $0x528] sm:$0xff]
        %v414 = vld [vmem:[#allocation6 + $0x530] sm:$0xff]
        %v415 = vld [vmem:[#allocation6 + $0x538] sm:$0xff]
        %v416 = vld [vmem:[#allocation6 + $0x540] sm:$0xff]
        %v417 = vld [vmem:[#allocation6 + $0x548] sm:$0xff]
        %v418 = vld [vmem:[#allocation6 + $0x550] sm:$0xff]
        %v419 = vld [vmem:[#allocation6 + $0x558] sm:$0xff]
        %v420 = vld [vmem:[#allocation6 + $0x560] sm:$0xff]
        %v421 = vld [vmem:[#allocation6 + $0x568] sm:$0xff]
        %v422 = vld [vmem:[#allocation6 + $0x570] sm:$0xff]
        %v423 = vld [vmem:[#allocation6 + $0x578] sm:$0xff]
        %v424 = vld [vmem:[#allocation6 + $0x580] sm:$0xff]
        %v425 = vld [vmem:[#allocation6 + $0x588] sm:$0xff]
        %v426 = vld [vmem:[#allocation6 + $0x590] sm:$0xff]
        %v427 = vld [vmem:[#allocation6 + $0x598] sm:$0xff]
        %v428 = vld [vmem:[#allocation6 + $0x5a0] sm:$0xff]
        %v429 = vld [vmem:[#allocation6 + $0x5a8] sm:$0xff]
        %v430 = vld [vmem:[#allocation6 + $0x5b0] sm:$0xff]
        %v431 = vld [vmem:[#allocation6 + $0x5b8] sm:$0xff]
        %v432 = vld [vmem:[#allocation6 + $0x5c0] sm:$0xff]
        %v433 = vld [vmem:[#allocation6 + $0x5c8] sm:$0xff]
        %v434 = vld [vmem:[#allocation6 + $0x5d0] sm:$0xff]
        %v435 = vld [vmem:[#allocation6 + $0x5d8] sm:$0xff]
        %v436 = vld [vmem:[#allocation6 + $0x5e0] sm:$0xff]
        %v437 = vld [vmem:[#allocation6 + $0x5e8] sm:$0xff]
        %v438 = vld [vmem:[#allocation6 + $0x5f0] sm:$0xff]
        %v439 = vld [vmem:[#allocation6 + $0x5f8] sm:$0xff]
        %v440 = vld [vmem:[#allocation6 + $0x600] sm:$0xff]
        %v441 = vld [vmem:[#allocation6 + $0x608] sm:$0xff]
        %v442 = vld [vmem:[#allocation6 + $0x610] sm:$0xff]
        %v443 = vld [vmem:[#allocation6 + $0x618] sm:$0xff]
        %v444 = vld [vmem:[#allocation6 + $0x620] sm:$0xff]
        %v445 = vld [vmem:[#allocation6 + $0x628] sm:$0xff]
        %v446 = vld [vmem:[#allocation6 + $0x630] sm:$0xff]
        %v447 = vld [vmem:[#allocation6 + $0x638] sm:$0xff]
        %v448 = vld [vmem:[#allocation6 + $0x640] sm:$0xff]
        %v449 = vld [vmem:[#allocation6 + $0x648] sm:$0xff]
        %v450 = vld [vmem:[#allocation6 + $0x650] sm:$0xff]
        %v451 = vld [vmem:[#allocation6 + $0x658] sm:$0xff]
        %v452 = vld [vmem:[#allocation6 + $0x660] sm:$0xff]
        %v453 = vld [vmem:[#allocation6 + $0x668] sm:$0xff]
        %v454 = vld [vmem:[#allocation6 + $0x670] sm:$0xff]
        %v455 = vld [vmem:[#allocation6 + $0x678] sm:$0xff]
        %v456 = vld [vmem:[#allocation6 + $0x680] sm:$0xff]
        %v457 = vld [vmem:[#allocation6 + $0x688] sm:$0xff]
        %v458 = vld [vmem:[#allocation6 + $0x690] sm:$0xff]
        %v459 = vld [vmem:[#allocation6 + $0x698] sm:$0xff]
        %v460 = vld [vmem:[#allocation6 + $0x6a0] sm:$0xff]
        %v461 = vld [vmem:[#allocation6 + $0x6a8] sm:$0xff]
        %v462 = vld [vmem:[#allocation6 + $0x6b0] sm:$0xff]
        %v463 = vld [vmem:[#allocation6 + $0x6b8] sm:$0xff]
        %v464 = vld [vmem:[#allocation6 + $0x6c0] sm:$0xff]
        %v465 = vld [vmem:[#allocation6 + $0x6c8] sm:$0xff]
        %v466 = vld [vmem:[#allocation6 + $0x6d0] sm:$0xff]
        %v467 = vld [vmem:[#allocation6 + $0x6d8] sm:$0xff]
        %v468 = vld [vmem:[#allocation6 + $0x6e0] sm:$0xff]
        %v469 = vld [vmem:[#allocation6 + $0x6e8] sm:$0xff]
        %v470 = vld [vmem:[#allocation6 + $0x6f0] sm:$0xff]
        %v471 = vld [vmem:[#allocation6 + $0x6f8] sm:$0xff]
        %v472 = vld [vmem:[#allocation6 + $0x700] sm:$0xff]
        %v473 = vld [vmem:[#allocation6 + $0x708] sm:$0xff]
        %v474 = vld [vmem:[#allocation6 + $0x710] sm:$0xff]
        %v475 = vld [vmem:[#allocation6 + $0x718] sm:$0xff]
        %v476 = vld [vmem:[#allocation6 + $0x720] sm:$0xff]
        %v477 = vld [vmem:[#allocation6 + $0x728] sm:$0xff]
        %v478 = vld [vmem:[#allocation6 + $0x730] sm:$0xff]
        %v479 = vld [vmem:[#allocation6 + $0x738] sm:$0xff]
        %v480 = vld [vmem:[#allocation6 + $0x740] sm:$0xff]
        %v481 = vld [vmem:[#allocation6 + $0x748] sm:$0xff]
        %v482 = vld [vmem:[#allocation6 + $0x750] sm:$0xff]
        %v483 = vld [vmem:[#allocation6 + $0x758] sm:$0xff]
        %v484 = vld [vmem:[#allocation6 + $0x760] sm:$0xff]
        %v485 = vld [vmem:[#allocation6 + $0x768] sm:$0xff]
        %v486 = vld [vmem:[#allocation6 + $0x770] sm:$0xff]
        %v487 = vld [vmem:[#allocation6 + $0x778] sm:$0xff]
        %v488 = vld [vmem:[#allocation6 + $0x780] sm:$0xff]
        %v489 = vld [vmem:[#allocation6 + $0x788] sm:$0xff]
        %v490 = vld [vmem:[#allocation6 + $0x790] sm:$0xff]
        %v491 = vld [vmem:[#allocation6 + $0x798] sm:$0xff]
        %v492 = vld [vmem:[#allocation6 + $0x7a0] sm:$0xff]
        %v493 = vld [vmem:[#allocation6 + $0x7a8] sm:$0xff]
        %v494 = vld [vmem:[#allocation6 + $0x7b0] sm:$0xff]
        %v495 = vld [vmem:[#allocation6 + $0x7b8] sm:$0xff]
        %v496 = vld [vmem:[#allocation6 + $0x7c0] sm:$0xff]
        %v497 = vld [vmem:[#allocation6 + $0x7c8] sm:$0xff]
        %v498 = vld [vmem:[#allocation6 + $0x7d0] sm:$0xff]
        %v499 = vld [vmem:[#allocation6 + $0x7d8] sm:$0xff]
        %v500 = vld [vmem:[#allocation6 + $0x7e0] sm:$0xff]
        %v501 = vld [vmem:[#allocation6 + $0x7e8] sm:$0xff]
        %v502 = vld [vmem:[#allocation6 + $0x7f0] sm:$0xff]
        %v503 = vld [vmem:[#allocation6 + $0x7f8] sm:$0xff]
        %504 = vmatprep.subr.mxu0 %v249
        %505 = vmatpush1.msra.mxu0 %v248
        %506 = vmatprep.subr.mxu0 %v257
        %507 = vmatpush1.msra.mxu0 %v256
        %508 = vmatprep.subr.mxu0 %v265
        %509 = vmatpush1.msra.mxu0 %v264
        %510 = vmatprep.subr.mxu0 %v273
        %511 = vmatpush1.msra.mxu0 %v272
        %512 = vmatprep.subr.mxu0 %v281
        %513 = vmatpush1.msra.mxu0 %v280
        %514 = vmatprep.subr.mxu0 %v289
        %515 = vmatpush1.msra.mxu0 %v288
        %516 = vmatprep.subr.mxu0 %v297
        %517 = vmatpush1.msra.mxu0 %v296
        %518 = vmatprep.subr.mxu0 %v305
        %519 = vmatpush1.msra.mxu0 %v304
        %520 = vmatprep.subr.mxu0 %v313
        %521 = vmatpush1.msra.mxu0 %v312
        %522 = vmatprep.subr.mxu0 %v321
        %523 = vmatpush1.msra.mxu0 %v320
        %524 = vmatprep.subr.mxu0 %v329
        %525 = vmatpush1.msra.mxu0 %v328
        %526 = vmatprep.subr.mxu0 %v337
        %527 = vmatpush1.msra.mxu0 %v336
        %528 = vmatprep.subr.mxu0 %v345
        %529 = vmatpush1.msra.mxu0 %v344
        %530 = vmatprep.subr.mxu0 %v353
        %531 = vmatpush1.msra.mxu0 %v352
        %532 = vmatprep.subr.mxu0 %v361
        %533 = vmatpush1.msra.mxu0 %v360
        %534 = vmatprep.subr.mxu0 %v369
        %535 = vmatpush1.msra.mxu0 %v368
        %536 = vmatprep.subr.mxu0 %v377
        %537 = vmatpush1.msra.mxu0 %v376
        %538 = vmatprep.subr.mxu0 %v385
        %539 = vmatpush1.msra.mxu0 %v384
        %540 = vmatprep.subr.mxu0 %v393
        %541 = vmatpush1.msra.mxu0 %v392
        %542 = vmatprep.subr.mxu0 %v401
        %543 = vmatpush1.msra.mxu0 %v400
        %544 = vmatprep.subr.mxu0 %v409
        %545 = vmatpush1.msra.mxu0 %v408
        %546 = vmatprep.subr.mxu0 %v417
        %547 = vmatpush1.msra.mxu0 %v416
        %548 = vmatprep.subr.mxu0 %v425
        %549 = vmatpush1.msra.mxu0 %v424
        %550 = vmatprep.subr.mxu0 %v433
        %551 = vmatpush1.msra.mxu0 %v432
        %552 = vmatprep.subr.mxu0 %v441
        %553 = vmatpush1.msra.mxu0 %v440
        %554 = vmatprep.subr.mxu0 %v449
        %555 = vmatpush1.msra.mxu0 %v448
        %556 = vmatprep.subr.mxu0 %v457
        %557 = vmatpush1.msra.mxu0 %v456
        %558 = vmatprep.subr.mxu0 %v465
        %559 = vmatpush1.msra.mxu0 %v464
        %560 = vmatprep.subr.mxu0 %v473
        %561 = vmatpush1.msra.mxu0 %v472
        %562 = vmatprep.subr.mxu0 %v481
        %563 = vmatpush1.msra.mxu0 %v480
        %564 = vmatprep.subr.mxu0 %v489
        %565 = vmatpush1.msra.mxu0 %v488
        %566 = vmatprep.subr.mxu0 %v497
        %567 = vmatpush1.msra.mxu0 %v496
        %568 = vmatprep.mubr.f32.mxu0 %v247
        %569 = vmatmul.mubr.f32.gmra.mrb[0].mxu0 %v246
        %v570 = vpop.f32.mrb[0].mxu0
        %v571 = vadd.f32 0.0, %v570
        %v572 = vpop.f32.mrb[0].mxu0
        %v573 = vadd.f32 0.0, %v572
        %574 = vdwg.mxu0
        %575 = vmatprep.subr.mxu0 %v251
        %576 = vmatpush1.msra.mxu0 %v250
        %577 = vmatprep.subr.mxu0 %v259
        %578 = vmatpush1.msra.mxu0 %v258
        %579 = vmatprep.subr.mxu0 %v267
        %580 = vmatpush1.msra.mxu0 %v266
        %581 = vmatprep.subr.mxu0 %v275
        %582 = vmatpush1.msra.mxu0 %v274
        %583 = vmatprep.subr.mxu0 %v283
        %584 = vmatpush1.msra.mxu0 %v282
        %585 = vmatprep.subr.mxu0 %v291
        %586 = vmatpush1.msra.mxu0 %v290
        %587 = vmatprep.subr.mxu0 %v299
        %588 = vmatpush1.msra.mxu0 %v298
        %589 = vmatprep.subr.mxu0 %v307
        %590 = vmatpush1.msra.mxu0 %v306
        %591 = vmatprep.subr.mxu0 %v315
        %592 = vmatpush1.msra.mxu0 %v314
        %593 = vmatprep.subr.mxu0 %v323
        %594 = vmatpush1.msra.mxu0 %v322
        %595 = vmatprep.subr.mxu0 %v331
        %596 = vmatpush1.msra.mxu0 %v330
        %597 = vmatprep.subr.mxu0 %v339
        %598 = vmatpush1.msra.mxu0 %v338
        %599 = vmatprep.subr.mxu0 %v347
        %600 = vmatpush1.msra.mxu0 %v346
        %601 = vmatprep.subr.mxu0 %v355
        %602 = vmatpush1.msra.mxu0 %v354
        %603 = vmatprep.subr.mxu0 %v363
        %604 = vmatpush1.msra.mxu0 %v362
        %605 = vmatprep.subr.mxu0 %v371
        %606 = vmatpush1.msra.mxu0 %v370
        %607 = vmatprep.subr.mxu0 %v379
        %608 = vmatpush1.msra.mxu0 %v378
        %609 = vmatprep.subr.mxu0 %v387
        %610 = vmatpush1.msra.mxu0 %v386
        %611 = vmatprep.subr.mxu0 %v395
        %612 = vmatpush1.msra.mxu0 %v394
        %613 = vmatprep.subr.mxu0 %v403
        %614 = vmatpush1.msra.mxu0 %v402
        %615 = vmatprep.subr.mxu0 %v411
        %616 = vmatpush1.msra.mxu0 %v410
        %617 = vmatprep.subr.mxu0 %v419
        %618 = vmatpush1.msra.mxu0 %v418
        %619 = vmatprep.subr.mxu0 %v427
        %620 = vmatpush1.msra.mxu0 %v426
        %621 = vmatprep.subr.mxu0 %v435
        %622 = vmatpush1.msra.mxu0 %v434
        %623 = vmatprep.subr.mxu0 %v443
        %624 = vmatpush1.msra.mxu0 %v442
        %625 = vmatprep.subr.mxu0 %v451
        %626 = vmatpush1.msra.mxu0 %v450
        %627 = vmatprep.subr.mxu0 %v459
        %628 = vmatpush1.msra.mxu0 %v458
        %629 = vmatprep.subr.mxu0 %v467
        %630 = vmatpush1.msra.mxu0 %v466
        %631 = vmatprep.subr.mxu0 %v475
        %632 = vmatpush1.msra.mxu0 %v474
        %633 = vmatprep.subr.mxu0 %v483
        %634 = vmatpush1.msra.mxu0 %v482
        %635 = vmatprep.subr.mxu0 %v491
        %636 = vmatpush1.msra.mxu0 %v490
        %637 = vmatprep.subr.mxu0 %v499
        %638 = vmatpush1.msra.mxu0 %v498
        %639 = vmatprep.mubr.f32.mxu0 %v247
        %640 = vmatmul.mubr.f32.gmra.mrb[0].mxu0 %v246
        %v641 = vpop.f32.mrb[0].mxu0
        %v642 = vadd.f32 0.0, %v641
        %v643 = vpop.f32.mrb[0].mxu0
        %v644 = vadd.f32 0.0, %v643
        %645 = vdwg.mxu0
        %646 = vmatprep.subr.mxu0 %v253
        %647 = vmatpush1.msra.mxu0 %v252
        %648 = vmatprep.subr.mxu0 %v261
        %649 = vmatpush1.msra.mxu0 %v260
        %650 = vmatprep.subr.mxu0 %v269
        %651 = vmatpush1.msra.mxu0 %v268
        %652 = vmatprep.subr.mxu0 %v277
        %653 = vmatpush1.msra.mxu0 %v276
        %654 = vmatprep.subr.mxu0 %v285
        %655 = vmatpush1.msra.mxu0 %v284
        %656 = vmatprep.subr.mxu0 %v293
        %657 = vmatpush1.msra.mxu0 %v292
        %658 = vmatprep.subr.mxu0 %v301
        %659 = vmatpush1.msra.mxu0 %v300
        %660 = vmatprep.subr.mxu0 %v309
        %661 = vmatpush1.msra.mxu0 %v308
        %662 = vmatprep.subr.mxu0 %v317
        %663 = vmatpush1.msra.mxu0 %v316
        %664 = vmatprep.subr.mxu0 %v325
        %665 = vmatpush1.msra.mxu0 %v324
        %666 = vmatprep.subr.mxu0 %v333
        %667 = vmatpush1.msra.mxu0 %v332
        %668 = vmatprep.subr.mxu0 %v341
        %669 = vmatpush1.msra.mxu0 %v340
        %670 = vmatprep.subr.mxu0 %v349
        %671 = vmatpush1.msra.mxu0 %v348
        %672 = vmatprep.subr.mxu0 %v357
        %673 = vmatpush1.msra.mxu0 %v356
        %674 = vmatprep.subr.mxu0 %v365
        %675 = vmatpush1.msra.mxu0 %v364
        %676 = vmatprep.subr.mxu0 %v373
        %677 = vmatpush1.msra.mxu0 %v372
        %678 = vmatprep.subr.mxu0 %v381
        %679 = vmatpush1.msra.mxu0 %v380
        %680 = vmatprep.subr.mxu0 %v389
        %681 = vmatpush1.msra.mxu0 %v388
        %682 = vmatprep.subr.mxu0 %v397
        %683 = vmatpush1.msra.mxu0 %v396
        %684 = vmatprep.subr.mxu0 %v405
        %685 = vmatpush1.msra.mxu0 %v404
        %686 = vmatprep.subr.mxu0 %v413
        %687 = vmatpush1.msra.mxu0 %v412
        %688 = vmatprep.subr.mxu0 %v421
        %689 = vmatpush1.msra.mxu0 %v420
        %690 = vmatprep.subr.mxu0 %v429
        %691 = vmatpush1.msra.mxu0 %v428
        %692 = vmatprep.subr.mxu0 %v437
        %693 = vmatpush1.msra.mxu0 %v436
        %694 = vmatprep.subr.mxu0 %v445
        %695 = vmatpush1.msra.mxu0 %v444
        %696 = vmatprep.subr.mxu0 %v453
        %697 = vmatpush1.msra.mxu0 %v452
        %698 = vmatprep.subr.mxu0 %v461
        %699 = vmatpush1.msra.mxu0 %v460
        %700 = vmatprep.subr.mxu0 %v469
        %701 = vmatpush1.msra.mxu0 %v468
        %702 = vmatprep.subr.mxu0 %v477
        %703 = vmatpush1.msra.mxu0 %v476
        %704 = vmatprep.subr.mxu0 %v485
        %705 = vmatpush1.msra.mxu0 %v484
        %706 = vmatprep.subr.mxu0 %v493
        %707 = vmatpush1.msra.mxu0 %v492
        %708 = vmatprep.subr.mxu0 %v501
        %709 = vmatpush1.msra.mxu0 %v500
        %710 = vmatprep.mubr.f32.mxu0 %v247
        %711 = vmatmul.mubr.f32.gmra.mrb[0].mxu0 %v246
        %v712 = vpop.f32.mrb[0].mxu0
        %v713 = vadd.f32 0.0, %v712
        %v714 = vpop.f32.mrb[0].mxu0
        %v715 = vadd.f32 0.0, %v714
        %716 = vdwg.mxu0
        %717 = vmatprep.subr.mxu0 %v255
        %718 = vmatpush1.msra.mxu0 %v254
        %719 = vmatprep.subr.mxu0 %v263
        %720 = vmatpush1.msra.mxu0 %v262
        %721 = vmatprep.subr.mxu0 %v271
        %722 = vmatpush1.msra.mxu0 %v270
        %723 = vmatprep.subr.mxu0 %v279
        %724 = vmatpush1.msra.mxu0 %v278
        %725 = vmatprep.subr.mxu0 %v287
        %726 = vmatpush1.msra.mxu0 %v286
        %727 = vmatprep.subr.mxu0 %v295
        %728 = vmatpush1.msra.mxu0 %v294
        %729 = vmatprep.subr.mxu0 %v303
        %730 = vmatpush1.msra.mxu0 %v302
        %731 = vmatprep.subr.mxu0 %v311
        %732 = vmatpush1.msra.mxu0 %v310
        %733 = vmatprep.subr.mxu0 %v319
        %734 = vmatpush1.msra.mxu0 %v318
        %735 = vmatprep.subr.mxu0 %v327
        %736 = vmatpush1.msra.mxu0 %v326
        %737 = vmatprep.subr.mxu0 %v335
        %738 = vmatpush1.msra.mxu0 %v334
        %739 = vmatprep.subr.mxu0 %v343
        %740 = vmatpush1.msra.mxu0 %v342
        %741 = vmatprep.subr.mxu0 %v351
        %742 = vmatpush1.msra.mxu0 %v350
        %743 = vmatprep.subr.mxu0 %v359
        %744 = vmatpush1.msra.mxu0 %v358
        %745 = vmatprep.subr.mxu0 %v367
        %746 = vmatpush1.msra.mxu0 %v366
        %747 = vmatprep.subr.mxu0 %v375
        %748 = vmatpush1.msra.mxu0 %v374
        %749 = vmatprep.subr.mxu0 %v383
        %750 = vmatpush1.msra.mxu0 %v382
        %751 = vmatprep.subr.mxu0 %v391
        %752 = vmatpush1.msra.mxu0 %v390
        %753 = vmatprep.subr.mxu0 %v399
        %754 = vmatpush1.msra.mxu0 %v398
        %755 = vmatprep.subr.mxu0 %v407
        %756 = vmatpush1.msra.mxu0 %v406
        %757 = vmatprep.subr.mxu0 %v415
        %758 = vmatpush1.msra.mxu0 %v414
        %759 = vmatprep.subr.mxu0 %v423
        %760 = vmatpush1.msra.mxu0 %v422
        %761 = vmatprep.subr.mxu0 %v431
        %762 = vmatpush1.msra.mxu0 %v430
        %763 = vmatprep.subr.mxu0 %v439
        %764 = vmatpush1.msra.mxu0 %v438
        %765 = vmatprep.subr.mxu0 %v447
        %766 = vmatpush1.msra.mxu0 %v446
        %767 = vmatprep.subr.mxu0 %v455
        %768 = vmatpush1.msra.mxu0 %v454
        %769 = vmatprep.subr.mxu0 %v463
        %770 = vmatpush1.msra.mxu0 %v462
        %771 = vmatprep.subr.mxu0 %v471
        %772 = vmatpush1.msra.mxu0 %v470
        %773 = vmatprep.subr.mxu0 %v479
        %774 = vmatpush1.msra.mxu0 %v478
        %775 = vmatprep.subr.mxu0 %v487
        %776 = vmatpush1.msra.mxu0 %v486
        %777 = vmatprep.subr.mxu0 %v495
        %778 = vmatpush1.msra.mxu0 %v494
        %779 = vmatprep.subr.mxu0 %v503
        %780 = vmatpush1.msra.mxu0 %v502
        %781 = vmatprep.mubr.f32.mxu0 %v247
        %782 = vmatmul.mubr.f32.gmra.mrb[0].mxu0 %v246
        %v783 = vpop.f32.mrb[0].mxu0
        %v784 = vadd.f32 0.0, %v783
        %v785 = vpop.f32.mrb[0].mxu0
        %v786 = vadd.f32 0.0, %v785
        %787 = vdwg.mxu0
        %v788 = vsub.f32 0.0, %v571
        %v789 = vsub.f32 0.0, %v573
        %v790 = vsub.f32 0.0, %v642
        %v791 = vsub.f32 0.0, %v644
        %v792 = vmul.f32 %v788, 1.442695
        %v793 = vpow.pop %v792
        %v794 = vmul.f32 %v789, 1.442695
        %v795 = vpow.pop %v794
        %v796 = vmul.f32 %v790, 1.442695
        %v797 = vpow.pop %v796
        %v798 = vmul.f32 %v791, 1.442695
        %v799 = vpow.pop %v798
        %v800 = vadd.f32 %v793, 1.0
        %v801 = vadd.f32 %v795, 1.0
        %v802 = vadd.f32 %v797, 1.0
        %v803 = vadd.f32 %v799, 1.0
        %v804 = vrcp.pop %v800
        %v805 = vrcp.pop %v801
        %v806 = vrcp.pop %v802
        %v807 = vrcp.pop %v803
        %v808 = vmul.f32 %v571, %v804
        %v809 = vmul.f32 %v573, %v805
        %v810 = vmul.f32 %v642, %v806
        %v811 = vmul.f32 %v644, %v807
        %v812 = vmul.f32 %v808, %v713
        %v813 = vmul.f32 %v809, %v715
        %v814 = vmul.f32 %v810, %v784
        %v815 = vmul.f32 %v811, %v786
        %v816 = vld [vmem:[#allocation8] sm:$0xff]
        %v817 = vld [vmem:[#allocation8 + $0x8] sm:$0xff]
        %v818 = vld [vmem:[#allocation8 + $0x10] sm:$0xff]
        %v819 = vld [vmem:[#allocation8 + $0x18] sm:$0xff]
        %v820 = vld [vmem:[#allocation8 + $0x20] sm:$0xff]
        %v821 = vld [vmem:[#allocation8 + $0x28] sm:$0xff]
        %v822 = vld [vmem:[#allocation8 + $0x30] sm:$0xff]
        %v823 = vld [vmem:[#allocation8 + $0x38] sm:$0xff]
        %v824 = vld [vmem:[#allocation8 + $0x40] sm:$0xff]
        %v825 = vld [vmem:[#allocation8 + $0x48] sm:$0xff]
        %v826 = vld [vmem:[#allocation8 + $0x50] sm:$0xff]
        %v827 = vld [vmem:[#allocation8 + $0x58] sm:$0xff]
        %v828 = vld [vmem:[#allocation8 + $0x60] sm:$0xff]
        %v829 = vld [vmem:[#allocation8 + $0x68] sm:$0xff]
        %v830 = vld [vmem:[#allocation8 + $0x70] sm:$0xff]
        %v831 = vld [vmem:[#allocation8 + $0x78] sm:$0xff]
        %v832 = vld [vmem:[#allocation8 + $0x80] sm:$0xff]
        %v833 = vld [vmem:[#allocation8 + $0x88] sm:$0xff]
        %v834 = vld [vmem:[#allocation8 + $0x90] sm:$0xff]
        %v835 = vld [vmem:[#allocation8 + $0x98] sm:$0xff]
        %v836 = vld [vmem:[#allocation8 + $0xa0] sm:$0xff]
        %v837 = vld [vmem:[#allocation8 + $0xa8] sm:$0xff]
        %v838 = vld [vmem:[#allocation8 + $0xb0] sm:$0xff]
        %v839 = vld [vmem:[#allocation8 + $0xb8] sm:$0xff]
        %v840 = vld [vmem:[#allocation8 + $0xc0] sm:$0xff]
        %v841 = vld [vmem:[#allocation8 + $0xc8] sm:$0xff]
        %v842 = vld [vmem:[#allocation8 + $0xd0] sm:$0xff]
        %v843 = vld [vmem:[#allocation8 + $0xd8] sm:$0xff]
        %v844 = vld [vmem:[#allocation8 + $0xe0] sm:$0xff]
        %v845 = vld [vmem:[#allocation8 + $0xe8] sm:$0xff]
        %v846 = vld [vmem:[#allocation8 + $0xf0] sm:$0xff]
        %v847 = vld [vmem:[#allocation8 + $0xf8] sm:$0xff]
        %v848 = vld [vmem:[#allocation8 + $0x100] sm:$0xff]
        %v849 = vld [vmem:[#allocation8 + $0x108] sm:$0xff]
        %v850 = vld [vmem:[#allocation8 + $0x110] sm:$0xff]
        %v851 = vld [vmem:[#allocation8 + $0x118] sm:$0xff]
        %v852 = vld [vmem:[#allocation8 + $0x120] sm:$0xff]
        %v853 = vld [vmem:[#allocation8 + $0x128] sm:$0xff]
        %v854 = vld [vmem:[#allocation8 + $0x130] sm:$0xff]
        %v855 = vld [vmem:[#allocation8 + $0x138] sm:$0xff]
        %v856 = vld [vmem:[#allocation8 + $0x140] sm:$0xff]
        %v857 = vld [vmem:[#allocation8 + $0x148] sm:$0xff]
        %v858 = vld [vmem:[#allocation8 + $0x150] sm:$0xff]
        %v859 = vld [vmem:[#allocation8 + $0x158] sm:$0xff]
        %v860 = vld [vmem:[#allocation8 + $0x160] sm:$0xff]
        %v861 = vld [vmem:[#allocation8 + $0x168] sm:$0xff]
        %v862 = vld [vmem:[#allocation8 + $0x170] sm:$0xff]
        %v863 = vld [vmem:[#allocation8 + $0x178] sm:$0xff]
        %v864 = vld [vmem:[#allocation8 + $0x180] sm:$0xff]
        %v865 = vld [vmem:[#allocation8 + $0x188] sm:$0xff]
        %v866 = vld [vmem:[#allocation8 + $0x190] sm:$0xff]
        %v867 = vld [vmem:[#allocation8 + $0x198] sm:$0xff]
        %v868 = vld [vmem:[#allocation8 + $0x1a0] sm:$0xff]
        %v869 = vld [vmem:[#allocation8 + $0x1a8] sm:$0xff]
        %v870 = vld [vmem:[#allocation8 + $0x1b0] sm:$0xff]
        %v871 = vld [vmem:[#allocation8 + $0x1b8] sm:$0xff]
        %v872 = vld [vmem:[#allocation8 + $0x1c0] sm:$0xff]
        %v873 = vld [vmem:[#allocation8 + $0x1c8] sm:$0xff]
        %v874 = vld [vmem:[#allocation8 + $0x1d0] sm:$0xff]
        %v875 = vld [vmem:[#allocation8 + $0x1d8] sm:$0xff]
        %v876 = vld [vmem:[#allocation8 + $0x1e0] sm:$0xff]
        %v877 = vld [vmem:[#allocation8 + $0x1e8] sm:$0xff]
        %v878 = vld [vmem:[#allocation8 + $0x1f0] sm:$0xff]
        %v879 = vld [vmem:[#allocation8 + $0x1f8] sm:$0xff]
        %v880 = vld [vmem:[#allocation8 + $0x200] sm:$0xff]
        %v881 = vld [vmem:[#allocation8 + $0x208] sm:$0xff]
        %v882 = vld [vmem:[#allocation8 + $0x210] sm:$0xff]
        %v883 = vld [vmem:[#allocation8 + $0x218] sm:$0xff]
        %v884 = vld [vmem:[#allocation8 + $0x220] sm:$0xff]
        %v885 = vld [vmem:[#allocation8 + $0x228] sm:$0xff]
        %v886 = vld [vmem:[#allocation8 + $0x230] sm:$0xff]
        %v887 = vld [vmem:[#allocation8 + $0x238] sm:$0xff]
        %v888 = vld [vmem:[#allocation8 + $0x240] sm:$0xff]
        %v889 = vld [vmem:[#allocation8 + $0x248] sm:$0xff]
        %v890 = vld [vmem:[#allocation8 + $0x250] sm:$0xff]
        %v891 = vld [vmem:[#allocation8 + $0x258] sm:$0xff]
        %v892 = vld [vmem:[#allocation8 + $0x260] sm:$0xff]
        %v893 = vld [vmem:[#allocation8 + $0x268] sm:$0xff]
        %v894 = vld [vmem:[#allocation8 + $0x270] sm:$0xff]
        %v895 = vld [vmem:[#allocation8 + $0x278] sm:$0xff]
        %v896 = vld [vmem:[#allocation8 + $0x280] sm:$0xff]
        %v897 = vld [vmem:[#allocation8 + $0x288] sm:$0xff]
        %v898 = vld [vmem:[#allocation8 + $0x290] sm:$0xff]
        %v899 = vld [vmem:[#allocation8 + $0x298] sm:$0xff]
        %v900 = vld [vmem:[#allocation8 + $0x2a0] sm:$0xff]
        %v901 = vld [vmem:[#allocation8 + $0x2a8] sm:$0xff]
        %v902 = vld [vmem:[#allocation8 + $0x2b0] sm:$0xff]
        %v903 = vld [vmem:[#allocation8 + $0x2b8] sm:$0xff]
        %v904 = vld [vmem:[#allocation8 + $0x2c0] sm:$0xff]
        %v905 = vld [vmem:[#allocation8 + $0x2c8] sm:$0xff]
        %v906 = vld [vmem:[#allocation8 + $0x2d0] sm:$0xff]
        %v907 = vld [vmem:[#allocation8 + $0x2d8] sm:$0xff]
        %v908 = vld [vmem:[#allocation8 + $0x2e0] sm:$0xff]
        %v909 = vld [vmem:[#allocation8 + $0x2e8] sm:$0xff]
        %v910 = vld [vmem:[#allocation8 + $0x2f0] sm:$0xff]
        %v911 = vld [vmem:[#allocation8 + $0x2f8] sm:$0xff]
        %v912 = vld [vmem:[#allocation8 + $0x300] sm:$0xff]
        %v913 = vld [vmem:[#allocation8 + $0x308] sm:$0xff]
        %v914 = vld [vmem:[#allocation8 + $0x310] sm:$0xff]
        %v915 = vld [vmem:[#allocation8 + $0x318] sm:$0xff]
        %v916 = vld [vmem:[#allocation8 + $0x320] sm:$0xff]
        %v917 = vld [vmem:[#allocation8 + $0x328] sm:$0xff]
        %v918 = vld [vmem:[#allocation8 + $0x330] sm:$0xff]
        %v919 = vld [vmem:[#allocation8 + $0x338] sm:$0xff]
        %v920 = vld [vmem:[#allocation8 + $0x340] sm:$0xff]
        %v921 = vld [vmem:[#allocation8 + $0x348] sm:$0xff]
        %v922 = vld [vmem:[#allocation8 + $0x350] sm:$0xff]
        %v923 = vld [vmem:[#allocation8 + $0x358] sm:$0xff]
        %v924 = vld [vmem:[#allocation8 + $0x360] sm:$0xff]
        %v925 = vld [vmem:[#allocation8 + $0x368] sm:$0xff]
        %v926 = vld [vmem:[#allocation8 + $0x370] sm:$0xff]
        %v927 = vld [vmem:[#allocation8 + $0x378] sm:$0xff]
        %v928 = vld [vmem:[#allocation8 + $0x380] sm:$0xff]
        %v929 = vld [vmem:[#allocation8 + $0x388] sm:$0xff]
        %v930 = vld [vmem:[#allocation8 + $0x390] sm:$0xff]
        %v931 = vld [vmem:[#allocation8 + $0x398] sm:$0xff]
        %v932 = vld [vmem:[#allocation8 + $0x3a0] sm:$0xff]
        %v933 = vld [vmem:[#allocation8 + $0x3a8] sm:$0xff]
        %v934 = vld [vmem:[#allocation8 + $0x3b0] sm:$0xff]
        %v935 = vld [vmem:[#allocation8 + $0x3b8] sm:$0xff]
        %v936 = vld [vmem:[#allocation8 + $0x3c0] sm:$0xff]
        %v937 = vld [vmem:[#allocation8 + $0x3c8] sm:$0xff]
        %v938 = vld [vmem:[#allocation8 + $0x3d0] sm:$0xff]
        %v939 = vld [vmem:[#allocation8 + $0x3d8] sm:$0xff]
        %v940 = vld [vmem:[#allocation8 + $0x3e0] sm:$0xff]
        %v941 = vld [vmem:[#allocation8 + $0x3e8] sm:$0xff]
        %v942 = vld [vmem:[#allocation8 + $0x3f0] sm:$0xff]
        %v943 = vld [vmem:[#allocation8 + $0x3f8] sm:$0xff]
        %944 = vmatprep.subr.mxu0 %v817
        %945 = vmatpush1.msra.mxu0 %v816
        %946 = vmatprep.subr.mxu0 %v819
        %947 = vmatpush1.msra.mxu0 %v818
        %948 = vmatprep.subr.mxu0 %v821
        %949 = vmatpush1.msra.mxu0 %v820
        %950 = vmatprep.subr.mxu0 %v823
        %951 = vmatpush1.msra.mxu0 %v822
        %952 = vmatprep.subr.mxu0 %v825
        %953 = vmatpush1.msra.mxu0 %v824
        %954 = vmatprep.subr.mxu0 %v827
        %955 = vmatpush1.msra.mxu0 %v826
        %956 = vmatprep.subr.mxu0 %v829
        %957 = vmatpush1.msra.mxu0 %v828
        %958 = vmatprep.subr.mxu0 %v831
        %959 = vmatpush1.msra.mxu0 %v830
        %960 = vmatprep.subr.mxu0 %v833
        %961 = vmatpush1.msra.mxu0 %v832
        %962 = vmatprep.subr.mxu0 %v835
        %963 = vmatpush1.msra.mxu0 %v834
        %964 = vmatprep.subr.mxu0 %v837
        %965 = vmatpush1.msra.mxu0 %v836
        %966 = vmatprep.subr.mxu0 %v839
        %967 = vmatpush1.msra.mxu0 %v838
        %968 = vmatprep.subr.mxu0 %v841
        %969 = vmatpush1.msra.mxu0 %v840
        %970 = vmatprep.subr.mxu0 %v843
        %971 = vmatpush1.msra.mxu0 %v842
        %972 = vmatprep.subr.mxu0 %v845
        %973 = vmatpush1.msra.mxu0 %v844
        %974 = vmatprep.subr.mxu0 %v847
        %975 = vmatpush1.msra.mxu0 %v846
        %976 = vmatprep.subr.mxu0 %v849
        %977 = vmatpush1.msra.mxu0 %v848
        %978 = vmatprep.subr.mxu0 %v851
        %979 = vmatpush1.msra.mxu0 %v850
        %980 = vmatprep.subr.mxu0 %v853
        %981 = vmatpush1.msra.mxu0 %v852
        %982 = vmatprep.subr.mxu0 %v855
        %983 = vmatpush1.msra.mxu0 %v854
        %984 = vmatprep.subr.mxu0 %v857
        %985 = vmatpush1.msra.mxu0 %v856
        %986 = vmatprep.subr.mxu0 %v859
        %987 = vmatpush1.msra.mxu0 %v858
        %988 = vmatprep.subr.mxu0 %v861
        %989 = vmatpush1.msra.mxu0 %v860
        %990 = vmatprep.subr.mxu0 %v863
        %991 = vmatpush1.msra.mxu0 %v862
        %992 = vmatprep.subr.mxu0 %v865
        %993 = vmatpush1.msra.mxu0 %v864
        %994 = vmatprep.subr.mxu0 %v867
        %995 = vmatpush1.msra.mxu0 %v866
        %996 = vmatprep.subr.mxu0 %v869
        %997 = vmatpush1.msra.mxu0 %v868
        %998 = vmatprep.subr.mxu0 %v871
        %999 = vmatpush1.msra.mxu0 %v870
        %1000 = vmatprep.subr.mxu0 %v873
        %1001 = vmatpush1.msra.mxu0 %v872
        %1002 = vmatprep.subr.mxu0 %v875
        %1003 = vmatpush1.msra.mxu0 %v874
        %1004 = vmatprep.subr.mxu0 %v877
        %1005 = vmatpush1.msra.mxu0 %v876
        %1006 = vmatprep.subr.mxu0 %v879
        %1007 = vmatpush1.msra.mxu0 %v878
        %1008 = vmatprep.mubr.f32.mxu0 %v813
        %1009 = vmatmul.mubr.f32.gmra.mrb[0].mxu0 %v812
        %v1010 = vpop.f32.mrb[0].mxu0
        %v1011 = vadd.f32 0.0, %v1010
        %v1012 = vpop.f32.mrb[0].mxu0
        %v1013 = vadd.f32 0.0, %v1012
        %1014 = vdwg.mxu0
        %1015 = vmatprep.subr.mxu0 %v881
        %1016 = vmatpush1.msra.mxu0 %v880
        %1017 = vmatprep.subr.mxu0 %v883
        %1018 = vmatpush1.msra.mxu0 %v882
        %1019 = vmatprep.subr.mxu0 %v885
        %1020 = vmatpush1.msra.mxu0 %v884
        %1021 = vmatprep.subr.mxu0 %v887
        %1022 = vmatpush1.msra.mxu0 %v886
        %1023 = vmatprep.subr.mxu0 %v889
        %1024 = vmatpush1.msra.mxu0 %v888
        %1025 = vmatprep.subr.mxu0 %v891
        %1026 = vmatpush1.msra.mxu0 %v890
        %1027 = vmatprep.subr.mxu0 %v893
        %1028 = vmatpush1.msra.mxu0 %v892
        %1029 = vmatprep.subr.mxu0 %v895
        %1030 = vmatpush1.msra.mxu0 %v894
        %1031 = vmatprep.subr.mxu0 %v897
        %1032 = vmatpush1.msra.mxu0 %v896
        %1033 = vmatprep.subr.mxu0 %v899
        %1034 = vmatpush1.msra.mxu0 %v898
        %1035 = vmatprep.subr.mxu0 %v901
        %1036 = vmatpush1.msra.mxu0 %v900
        %1037 = vmatprep.subr.mxu0 %v903
        %1038 = vmatpush1.msra.mxu0 %v902
        %1039 = vmatprep.subr.mxu0 %v905
        %1040 = vmatpush1.msra.mxu0 %v904
        %1041 = vmatprep.subr.mxu0 %v907
        %1042 = vmatpush1.msra.mxu0 %v906
        %1043 = vmatprep.subr.mxu0 %v909
        %1044 = vmatpush1.msra.mxu0 %v908
        %1045 = vmatprep.subr.mxu0 %v911
        %1046 = vmatpush1.msra.mxu0 %v910
        %1047 = vmatprep.subr.mxu0 %v913
        %1048 = vmatpush1.msra.mxu0 %v912
        %1049 = vmatprep.subr.mxu0 %v915
        %1050 = vmatpush1.msra.mxu0 %v914
        %1051 = vmatprep.subr.mxu0 %v917
        %1052 = vmatpush1.msra.mxu0 %v916
        %1053 = vmatprep.subr.mxu0 %v919
        %1054 = vmatpush1.msra.mxu0 %v918
        %1055 = vmatprep.subr.mxu0 %v921
        %1056 = vmatpush1.msra.mxu0 %v920
        %1057 = vmatprep.subr.mxu0 %v923
        %1058 = vmatpush1.msra.mxu0 %v922
        %1059 = vmatprep.subr.mxu0 %v925
        %1060 = vmatpush1.msra.mxu0 %v924
        %1061 = vmatprep.subr.mxu0 %v927
        %1062 = vmatpush1.msra.mxu0 %v926
        %1063 = vmatprep.subr.mxu0 %v929
        %1064 = vmatpush1.msra.mxu0 %v928
        %1065 = vmatprep.subr.mxu0 %v931
        %1066 = vmatpush1.msra.mxu0 %v930
        %1067 = vmatprep.subr.mxu0 %v933
        %1068 = vmatpush1.msra.mxu0 %v932
        %1069 = vmatprep.subr.mxu0 %v935
        %1070 = vmatpush1.msra.mxu0 %v934
        %1071 = vmatprep.subr.mxu0 %v937
        %1072 = vmatpush1.msra.mxu0 %v936
        %1073 = vmatprep.subr.mxu0 %v939
        %1074 = vmatpush1.msra.mxu0 %v938
        %1075 = vmatprep.subr.mxu0 %v941
        %1076 = vmatpush1.msra.mxu0 %v940
        %1077 = vmatprep.subr.mxu0 %v943
        %1078 = vmatpush1.msra.mxu0 %v942
        %1079 = vmatprep.mubr.f32.mxu0 %v815
        %1080 = vmatmul.mubr.f32.gmra.mrb[0].mxu0 %v814
        %v1081 = vpop.f32.mrb[0].mxu0
        %v1082 = vadd.f32 %v1011, %v1081
        %v1083 = vpop.f32.mrb[0].mxu0
        %v1084 = vadd.f32 %v1013, %v1083
        %1085 = vdwg.mxu0
        %p1086 = scmp.eq.s32.totalorder %s26, 0
        // Predicated region
        $region45: #{tpu_custom_call.1} parent=31 // pred_check
          %p1087 = pneg %p1086
        $region46: #{tpu_custom_call.1} parent=31 // pred_check_branch
          %1089 = sbr.rel (%p1087) target = $region48
        $region47: #{tpu_custom_call.1} parent=31 // pred_region
          %1090 = vst [vmem:[#allocation2] sm:$0xff] %v1082
          %1091 = vst [vmem:[#allocation2 + $0x8] sm:$0xff] %v1084
        $region48: #{tpu_custom_call.1} parent=31 // pred_fallthru
          _
        %p1092 = scmp.ne.s32.totalorder %s26, 0
        // Predicated region
        $region49: #{tpu_custom_call.1} parent=31 // pred_check
          %p1093 = pneg %p1092
        $region50: #{tpu_custom_call.1} parent=31 // pred_check_branch
          %1095 = sbr.rel (%p1093) target = $region52
        $region51: #{tpu_custom_call.1} parent=31 // pred_region
          %v1096 = vld [vmem:[#allocation2] sm:$0xff]
          %v1097 = vld [vmem:[#allocation2 + $0x8] sm:$0xff]
          %v1098 = vadd.f32 %v1096, %v1082
          %v1099 = vadd.f32 %v1097, %v1084
          %1100 = vst [vmem:[#allocation2] sm:$0xff] %v1098
          %1101 = vst [vmem:[#allocation2 + $0x8] sm:$0xff] %v1099
        $region52: #{tpu_custom_call.1} parent=31 // pred_fallthru
          _
        // Predicated region
        $region53: #{tpu_custom_call.1} parent=31 // pred_check
          %p1102 = pneg %p1086
        $region54: #{tpu_custom_call.1} parent=31 // pred_check_branch
          %1104 = sbr.rel (%p1102) target = $region56
        $region55: #{tpu_custom_call.1} parent=31 // pred_region
          %v1105 = vld [vmem:[#allocation2] sm:$0xff]
          %v1106 = vld [vmem:[#allocation2 + $0x8] sm:$0xff]
          %1107 = vst [vmem:[%s244] sm:$0xff] %v1105
          %1108 = vst [vmem:[%s244 + $0x8] sm:$0xff] %v1106
        $region56: #{tpu_custom_call.1} parent=31 // pred_fallthru
          _
        %s1109 = sand.u32 %s119, 1
        %s1110 = scalar_lea.sflag [#allocation5], %s1109
        %s1111 = sand.u32 %s119, 1
        %s1112 = smul.addr %s1111, 16
        %s1113 = scalar_lea.vmem [#allocation9], %s1112
        // Predicated region
        $region57: #{tpu_custom_call.1} parent=31 // pred_check
          %p1114 = pneg %p129
        $region58: #{tpu_custom_call.1} parent=31 // pred_check_branch
          %1116 = sbr.rel (%p1114) target = $region60
        $region59: #{tpu_custom_call.1} parent=31 // pred_region
          %s1118 = ssub.s32 256, 256
          %1119 = vsyncadd %s1110, %s1118
          %s1120 = smul.addr %s25, 2
          %s1121 = smul.addr %s1120, 128
          %s1122 = scalar_lea.hbm %s3, %s1121
          %s1124 = sshll.u32 %s1113, 4
          %s1125 = int_to_ptr.vmem [resolvable:$true] %s1124
          %1127 = dma.vmem_to_hbm [thread:$0]  %s1125, 256, %s1122, %s1110
        $region60: #{tpu_custom_call.1} parent=31 // pred_fallthru
          _
      $region32: #{tpu_custom_call.1} parent=5 // pred_fallthru
        _
      %p1128 = scmp.le.s32.totalorder 2, %s16
      // Predicated region
      $region61: #{tpu_custom_call.1} parent=5 // pred_check
        %p1129 = pneg %p1128
      $region62: #{tpu_custom_call.1} parent=5 // pred_check_branch
        %1131 = sbr.rel (%p1129) target = $region64
      $region63: #{tpu_custom_call.1} parent=5 // pred_region
        %s1132 = ssub.s32 %s16, 2
        // Predicated region
        $region65: #{tpu_custom_call.1} parent=63 // pred_check
          %p1133 = pneg %p135
        $region66: #{tpu_custom_call.1} parent=63 // pred_check_branch
          %1135 = sbr.rel (%p1133) target = $region68
        $region67: #{tpu_custom_call.1} parent=63 // pred_region
          %s1136 = sand.u32 %s120, 1
          %s1137 = scalar_lea.sflag [#allocation5], %s1136
          %s1138 = sand.u32 %s120, 1
          %s1139 = smul.addr %s1138, 16
          %s1140 = scalar_lea.vmem [#allocation9], %s1139
          %1141 = dma.done %s1137, 256
        $region68: #{tpu_custom_call.1} parent=63 // pred_fallthru
          _
      $region64: #{tpu_custom_call.1} parent=5 // pred_fallthru
        _
    $region6: #{tpu_custom_call.1} parent=1 // loop_footer
      %s20 = sadd.s32 1, %s16
    $region7: #{tpu_custom_call.1} parent=1 // loop_footer_branch
      %15 = sbr.rel target = $region3
    $region8: #{tpu_custom_call.1} parent=1 // loop_exit
      _
    %1142 = vsyncpa [#allocation4], 1
    %s1143 = scalar_lea.sflag [#allocation4], 1
    %1144 = vsyncpa %s1143, 1
    %1145 = vsyncpa [#allocation7], 1
    %1146 = vsyncpa [#allocation5], 1
    %s1147 = scalar_lea.sflag [#allocation5], 1
    %1148 = vsyncpa %s1147, 1

</llo_original>
